<compile_context>
chip_gen: v7x
topology: tpu7x:2x2x1
jax: 0.10.0
libtpu: 0.0.40
codegen_flags: <defaults>
</compile_context>

<pallas_src>
import functools

import jax
import jax.numpy as jnp
from jax.experimental import pallas as pl
from jax.experimental.pallas import tpu as pltpu


def _lstm_cell_kernel(xh_ref, c_ref, w_ref, b_ref, h_out_ref, c_out_ref,
                      *, hidden_dim):
    """One LSTM cell step on whole-array VMEM-resident operands.

    xh_ref: (B, IN+H)   concat([x, h_cur], axis=1)
    c_ref:  (B, H)      current cell state
    w_ref:  (IN+H, 4H)  Gates weight, transposed; i/r/o columns pre-scaled 0.5
    b_ref:  (1, 4H)     Gates bias; i/r/o entries pre-scaled 0.5
    """
    H = hidden_dim

    # Single MXU push: gates = [x, h] @ W^T + b     (B, 4H)
    gates = jnp.dot(xh_ref[...], w_ref[...],
                    preferred_element_type=jnp.float32) + b_ref[...]

    # Single EUP tanh over the whole (B, 4H) block.  Because the i/r/o columns
    # of W and b were pre-scaled by 0.5 in the wrapper, those lanes hold
    # tanh(z/2) and sigma(z) = 0.5*tanh(z/2) + 0.5 is a free VPU fma.
    t = jnp.tanh(gates)
    sig = 0.5 * t + 0.5

    in_gate = sig[:, 0 * H:1 * H]
    remember_gate = sig[:, 1 * H:2 * H]
    out_gate = sig[:, 2 * H:3 * H]
    cell_gate = t[:, 3 * H:4 * H]          # g column was NOT pre-scaled

    cell = remember_gate * c_ref[...] + in_gate * cell_gate
    hidden = out_gate * jnp.tanh(cell)

    h_out_ref[...] = hidden
    c_out_ref[...] = cell


def lstm_cell_forward(x, h_cur, c_cur, w_gates, b_gates, hidden_dim):
    """Pallas LSTMCell forward.

    x:       (B, IN)       float32
    h_cur:   (B, H)        float32
    c_cur:   (B, H)        float32
    w_gates: (4H, IN + H)  float32   -- nn.Linear weight of `Gates`
    b_gates: (4H,)         float32   -- nn.Linear bias of `Gates`
    Returns (hidden, cell), each (B, H) float32.
    """
    B, IN = x.shape
    H = hidden_dim

    x = jnp.asarray(x, jnp.float32)
    h_cur = jnp.asarray(h_cur, jnp.float32)
    c_cur = jnp.asarray(c_cur, jnp.float32)
    w = jnp.asarray(w_gates, jnp.float32)
    b = jnp.asarray(b_gates, jnp.float32)

    # Wrapper-side prep (cheap XLA ops on tiny arrays, keeps the kernel clean):
    #  * concat x|h along lanes -> single (B, IN+H) MXU operand
    #  * transpose weight to (IN+H, 4H)
    #  * fold the 0.5 prescale of the sigmoid half-angle identity into the
    #    i/r/o weight and bias columns (first 3H of the 4H gate axis).
    xh = jnp.concatenate([x, h_cur], axis=1)                       # (B, IN+H)
    gate_scale = jnp.concatenate(
        [jnp.full((3 * H,), 0.5, jnp.float32),
         jnp.ones((H,), jnp.float32)])                             # (4H,)
    w_t = w.T * gate_scale[None, :]                                # (IN+H, 4H)
    b2d = (b * gate_scale).reshape(1, 4 * H)                       # (1, 4H)

    kernel = functools.partial(_lstm_cell_kernel, hidden_dim=H)

    vmem = pl.BlockSpec(memory_space=pltpu.MemorySpace.VMEM)

    in_bytes = 4 * (xh.size + c_cur.size + w_t.size + b2d.size)
    out_bytes = 4 * (2 * B * H)
    cost = pl.CostEstimate(
        flops=2 * B * (IN + H) * 4 * H + 8 * B * H,
        transcendentals=B * 4 * H + B * H,
        bytes_accessed=in_bytes + out_bytes,
    )

    hidden, cell = pl.pallas_call(
        kernel,
        in_specs=[vmem, vmem, vmem, vmem],
        out_specs=(vmem, vmem),
        out_shape=(jax.ShapeDtypeStruct((B, H), jnp.float32),
                   jax.ShapeDtypeStruct((B, H), jnp.float32)),
        cost_estimate=cost,
    )(xh, c_cur, w_t, b2d)

    return hidden, cell


def lstm_cell_reference(x, h_cur, c_cur, w_gates, b_gates, hidden_dim):
    """Pure-JAX reference matching the PyTorch LSTMCell (nlstm.py) semantics."""
    stacked = jnp.concatenate([x, h_cur], axis=1)
    gates = jnp.dot(stacked, w_gates.T,
                    precision=jax.lax.Precision.HIGHEST) + b_gates
    i, r, o, g = jnp.split(gates, 4, axis=1)
    i, r, o = jax.nn.sigmoid(i), jax.nn.sigmoid(r), jax.nn.sigmoid(o)
    g = jnp.tanh(g)
    cell = r * c_cur + i * g
    hidden = o * jnp.tanh(cell)
    return hidden, cell


if __name__ == "__main__":
    # Small shapes consistent with the module: batch=8, input=32, hidden=32.
    B, IN, H = 8, 32, 32

    key = jax.random.PRNGKey(0)
    kx, kh, kc, kw, kb = jax.random.split(key, 5)

    x = jax.random.normal(kx, (B, IN), dtype=jnp.float32)
    h0 = jax.random.normal(kh, (B, H), dtype=jnp.float32)
    c0 = jax.random.normal(kc, (B, H), dtype=jnp.float32)

    # nn.Linear-style uniform(-1/sqrt(fan_in), +1/sqrt(fan_in)) init.
    fan_in = IN + H
    bound = 1.0 / (fan_in ** 0.5)
    w_gates = jax.random.uniform(kw, (4 * H, fan_in), jnp.float32, -bound, bound)
    b_gates = jax.random.uniform(kb, (4 * H,), jnp.float32, -bound, bound)

    hidden, cell = lstm_cell_forward(x, h0, c0, w_gates, b_gates, H)
    jax.block_until_ready((hidden, cell))

    # Sanity check against the pure-JAX reference.
    h_expect, c_expect = lstm_cell_reference(x, h0, c0, w_gates, b_gates, H)
    assert jnp.allclose(hidden, h_expect, rtol=1e-4, atol=1e-4), "hidden mismatch"
    assert jnp.allclose(cell, c_expect, rtol=1e-4, atol=1e-4), "cell mismatch"

    print("KERNEL_OK")
</pallas_src>

<mosaic_0001>
module attributes {stable_mosaic.version = 11 : i64} {
  func.func @_lstm_cell_kernel(%arg0: memref<8x64xf32, #tpu.memory_space<vmem>>, %arg1: memref<8x32xf32, #tpu.memory_space<vmem>>, %arg2: memref<64x128xf32, #tpu.memory_space<vmem>>, %arg3: memref<1x128xf32, #tpu.memory_space<vmem>>, %arg4: memref<8x32xf32, #tpu.memory_space<vmem>>, %arg5: memref<8x32xf32, #tpu.memory_space<vmem>>) attributes {dimension_semantics = [], scalar_prefetch = 0 : i64, scratch_operands = 0 : i64, tpu.core_type = #tpu.core_type<tc>} {
    %c0 = arith.constant 0 : index
    %c0_0 = arith.constant 0 : index
    %0 = vector.load %arg0[%c0, %c0_0] : memref<8x64xf32, #tpu.memory_space<vmem>>, vector<8x64xf32>
    %c0_1 = arith.constant 0 : index
    %c0_2 = arith.constant 0 : index
    %1 = vector.load %arg2[%c0_1, %c0_2] : memref<64x128xf32, #tpu.memory_space<vmem>>, vector<64x128xf32>
    %cst = arith.constant dense<0.000000e+00> : vector<8x128xf32>
    %2 = tpu.matmul %0, %1, %cst {dimension_numbers = #tpu.dot_dimension_numbers<[1], [0], [0], [1], [0, 0, 1, 1], [], []>} : vector<8x64xf32>, vector<64x128xf32>, vector<8x128xf32> -> vector<8x128xf32>
    %c0_3 = arith.constant 0 : index
    %c0_4 = arith.constant 0 : index
    %3 = vector.load %arg3[%c0_3, %c0_4] : memref<1x128xf32, #tpu.memory_space<vmem>>, vector<1x128xf32>
    %4 = vector.broadcast %3 : vector<1x128xf32> to vector<8x128xf32>
    %5 = arith.addf %2, %4 : vector<8x128xf32>
    %6 = math.tanh %5 : vector<8x128xf32>
    %cst_5 = arith.constant 5.000000e-01 : f32
    %7 = vector.broadcast %cst_5 : f32 to vector<8x128xf32>
    %8 = arith.mulf %7, %6 : vector<8x128xf32>
    %cst_6 = arith.constant 5.000000e-01 : f32
    %9 = vector.broadcast %cst_6 : f32 to vector<8x128xf32>
    %10 = arith.addf %8, %9 : vector<8x128xf32>
    %11 = vector.extract_strided_slice %10 {offsets = [0, 0], sizes = [8, 32], strides = [1, 1]} : vector<8x128xf32> to vector<8x32xf32>
    %12 = vector.extract_strided_slice %10 {offsets = [0, 32], sizes = [8, 32], strides = [1, 1]} : vector<8x128xf32> to vector<8x32xf32>
    %13 = vector.extract_strided_slice %10 {offsets = [0, 64], sizes = [8, 32], strides = [1, 1]} : vector<8x128xf32> to vector<8x32xf32>
    %14 = vector.extract_strided_slice %6 {offsets = [0, 96], sizes = [8, 32], strides = [1, 1]} : vector<8x128xf32> to vector<8x32xf32>
    %c0_7 = arith.constant 0 : index
    %c0_8 = arith.constant 0 : index
    %15 = vector.load %arg1[%c0_7, %c0_8] : memref<8x32xf32, #tpu.memory_space<vmem>>, vector<8x32xf32>
    %16 = arith.mulf %12, %15 : vector<8x32xf32>
    %17 = arith.mulf %11, %14 : vector<8x32xf32>
    %18 = arith.addf %16, %17 : vector<8x32xf32>
    %19 = math.tanh %18 : vector<8x32xf32>
    %20 = arith.mulf %13, %19 : vector<8x32xf32>
    %c0_9 = arith.constant 0 : index
    %c0_10 = arith.constant 0 : index
    %21 = vector.load %arg4[%c0_9, %c0_10] : memref<8x32xf32, #tpu.memory_space<vmem>>, vector<8x32xf32>
    tpu.vector_store %arg4[%c0_9, %c0_10], %20 {strides = array<i32>} : memref<8x32xf32, #tpu.memory_space<vmem>>, vector<8x32xf32>,
    %c0_11 = arith.constant 0 : index
    %c0_12 = arith.constant 0 : index
    %22 = vector.load %arg5[%c0_11, %c0_12] : memref<8x32xf32, #tpu.memory_space<vmem>>, vector<8x32xf32>
    tpu.vector_store %arg5[%c0_11, %c0_12], %18 {strides = array<i32>} : memref<8x32xf32, #tpu.memory_space<vmem>>, vector<8x32xf32>,
    return
  }
}

</mosaic_0001>

<llo_original>
// kernel: tpu_custom_call.1
$region0: #{tpu_custom_call.1}
  #allocation0 [shape = 'u32[]', space=smem, size = 0x4, offset = 0x4, fixed_abs, tag = 'smem constant byte address 0x4 - core index']
  #allocation1 [shape = 'u32[144,128]{1,0:T(1,128)}', space=vmem, size = 0x12000, scoped, tag = 'internal scratch']
  %s0 = inlined_call_operand.hbm [shape: f32[8,64], index: 0, kind: input, shape index: {}]
  %s1 = inlined_call_operand.hbm [shape: f32[8,32], index: 1, kind: input, shape index: {}]
  %s2 = inlined_call_operand.hbm [shape: f32[64,128], index: 2, kind: input, shape index: {}]
  %s3 = inlined_call_operand.vmem [shape: f32[1,128], index: 3, kind: input, shape index: {}]
  %s4 = inlined_call_operand.hbm [shape: f32[8,32], index: 4, kind: output, shape index: {0}]
  %s5 = inlined_call_operand.hbm [shape: f32[8,32], index: 5, kind: output, shape index: {1}]
  %6 = xla_tuple %s4, %s5
  %s7 = sld [smem:[#allocation0]]
  $region46: #{tpu_custom_call.1} parent=0
    _
  %s9 = ssub.s32 1, %s7
  %s10 = scalar_select 0, %s9, %s7
  $region1: #{tpu_custom_call.1} parent=0
    #allocation2 [shape = 'u8[4096]{0}', space=vmem, size = 0x1000, scoped, tag = 'input window, operand 0, single buffered']
    #allocation3 [shape = 's32[1]{0}', space=sflag, size = 0x4, scoped, tag = 'scoped memory for tpu_custom_call.1']
    #allocation4 [shape = 's32[1]{0}', space=sflag, size = 0x4, scoped, tag = 'scoped memory for tpu_custom_call.1']
    #allocation5 [shape = 'u8[4096]{0}', space=vmem, size = 0x1000, scoped, tag = 'input window, operand 1, single buffered']
    #allocation6 [shape = 's32[1]{0}', space=sflag, size = 0x4, scoped, tag = 'scoped memory for tpu_custom_call.1']
    #allocation7 [shape = 'u8[32768]{0}', space=vmem, size = 0x8000, scoped, tag = 'input window, operand 2, single buffered']
    #allocation8 [shape = 'u8[4096]{0}', space=vmem, size = 0x1000, scoped, tag = 'output window, operand 0, single buffered']
    #allocation9 [shape = 'u8[4096]{0}', space=vmem, size = 0x1000, scoped, tag = 'output window, operand 1, single buffered']
    #allocation10 [shape = 's32[1]{0}', space=sflag, size = 0x4, scoped, tag = 'scoped memory for tpu_custom_call.1']
    %11 = vsyncpa [#allocation3], 0
    %12 = vsyncpa [#allocation6], 0
    %13 = vsyncpa [#allocation4], 0
    %14 = vsyncpa [#allocation10], 0
    // Predicated region
    $region2: #{tpu_custom_call.1} parent=1 // pred_check
      _
    $region3: #{tpu_custom_call.1} parent=1 // pred_check_branch
      %16 = sbr.rel (0) target = $region5
    $region4: #{tpu_custom_call.1} parent=1 // pred_region
      %s18 = ssub.s32 128, 128
      %19 = vsyncadd [#allocation3], %s18
      %s21 = sshll.u32 [#allocation2], 4
      %s22 = int_to_ptr.vmem [resolvable:$true] %s21
      %24 = dma.hbm_to_vmem [thread:$0]  %s0, 128, %s22, [#allocation3]
    $region5: #{tpu_custom_call.1} parent=1 // pred_fallthru
      _
    // Predicated region
    $region6: #{tpu_custom_call.1} parent=1 // pred_check
      _
    $region7: #{tpu_custom_call.1} parent=1 // pred_check_branch
      %26 = sbr.rel (0) target = $region9
    $region8: #{tpu_custom_call.1} parent=1 // pred_region
      %s28 = ssub.s32 128, 128
      %29 = vsyncadd [#allocation6], %s28
      %s31 = sshll.u32 [#allocation5], 4
      %s32 = int_to_ptr.vmem [resolvable:$true] %s31
      %34 = dma.hbm_to_vmem [thread:$0]  %s1, 128, %s32, [#allocation6]
    $region9: #{tpu_custom_call.1} parent=1 // pred_fallthru
      _
    // Predicated region
    $region10: #{tpu_custom_call.1} parent=1 // pred_check
      _
    $region11: #{tpu_custom_call.1} parent=1 // pred_check_branch
      %36 = sbr.rel (0) target = $region13
    $region12: #{tpu_custom_call.1} parent=1 // pred_region
      %s38 = ssub.s32 1024, 1024
      %39 = vsyncadd [#allocation6], %s38
      %s40 = sshll.u32 [#allocation7], 4
      %s41 = int_to_ptr.vmem [resolvable:$true] %s40
      %46 = dma.hbm_to_vmem [thread:$0]  %s2, 1024, %s41, [#allocation6], 128, 128, 8
    $region13: #{tpu_custom_call.1} parent=1 // pred_fallthru
      _
    // Predicated region
    $region14: #{tpu_custom_call.1} parent=1 // pred_check
      _
    $region15: #{tpu_custom_call.1} parent=1 // pred_check_branch
      %48 = sbr.rel (0) target = $region17
    $region16: #{tpu_custom_call.1} parent=1 // pred_region
      _
    $region17: #{tpu_custom_call.1} parent=1 // pred_fallthru
      _
    // Predicated region
    $region18: #{tpu_custom_call.1} parent=1 // pred_check
      _
    $region19: #{tpu_custom_call.1} parent=1 // pred_check_branch
      %50 = sbr.rel (0) target = $region21
    $region20: #{tpu_custom_call.1} parent=1 // pred_region
      %51 = dma.done [#allocation3], 128
    $region21: #{tpu_custom_call.1} parent=1 // pred_fallthru
      _
    // Predicated region
    $region22: #{tpu_custom_call.1} parent=1 // pred_check
      _
    $region23: #{tpu_custom_call.1} parent=1 // pred_check_branch
      %53 = sbr.rel (0) target = $region25
    $region24: #{tpu_custom_call.1} parent=1 // pred_region
      %54 = dma.done [#allocation6], 128
    $region25: #{tpu_custom_call.1} parent=1 // pred_fallthru
      _
    // Predicated region
    $region26: #{tpu_custom_call.1} parent=1 // pred_check
      _
    $region27: #{tpu_custom_call.1} parent=1 // pred_check_branch
      %56 = sbr.rel (0) target = $region29
    $region28: #{tpu_custom_call.1} parent=1 // pred_region
      %57 = dma.done [#allocation6], 1024
    $region29: #{tpu_custom_call.1} parent=1 // pred_fallthru
      _
    %v58 = vld [vmem:[#allocation2] sm:$0xff]
    %v59 = vld [vmem:[#allocation7] sm:$0xff]
    %v60 = vld [vmem:[#allocation7 + $0x8] sm:$0xff]
    %v61 = vld [vmem:[#allocation7 + $0x10] sm:$0xff]
    %v62 = vld [vmem:[#allocation7 + $0x18] sm:$0xff]
    %v63 = vld [vmem:[#allocation7 + $0x20] sm:$0xff]
    %v64 = vld [vmem:[#allocation7 + $0x28] sm:$0xff]
    %v65 = vld [vmem:[#allocation7 + $0x30] sm:$0xff]
    %v66 = vld [vmem:[#allocation7 + $0x38] sm:$0xff]
    %v67 = vld [vmem:[%s3] sm:$0x1]
    %v69 = vlaneseq
    %v70 = vshrl.u32 %v69, 7
    %v71 = vsub.s32 0, %v70
    %v72 = vrot.slane %v67, %v71
    %vm74 = vcmask 523264
    %v76 = vsel %vm74, %v58, 0
    %78 = vmatprep.subr.mxu0 0.0
    %79 = vmatpush1.msra.mxu0 %v59
    %80 = vmatprep.subr.mxu0 0.0
    %81 = vmatpush1.msra.mxu0 %v60
    %82 = vmatprep.subr.mxu0 0.0
    %83 = vmatpush1.msra.mxu0 %v61
    %84 = vmatprep.subr.mxu0 0.0
    %85 = vmatpush1.msra.mxu0 %v62
    %86 = vmatprep.subr.mxu0 0.0
    %87 = vmatpush1.msra.mxu0 %v63
    %88 = vmatprep.subr.mxu0 0.0
    %89 = vmatpush1.msra.mxu0 %v64
    %90 = vmatprep.subr.mxu0 0.0
    %91 = vmatpush1.msra.mxu0 %v65
    %92 = vmatprep.subr.mxu0 0.0
    %93 = vmatpush1.msra.mxu0 %v66
    %94 = vmatprep.subr.mxu0 0.0
    %95 = vmatpush1.msra.mxu0 0.0
    %96 = vmatprep.subr.mxu0 0.0
    %97 = vmatpush1.msra.mxu0 0.0
    %98 = vmatprep.subr.mxu0 0.0
    %99 = vmatpush1.msra.mxu0 0.0
    %100 = vmatprep.subr.mxu0 0.0
    %101 = vmatpush1.msra.mxu0 0.0
    %102 = vmatprep.subr.mxu0 0.0
    %103 = vmatpush1.msra.mxu0 0.0
    %104 = vmatprep.subr.mxu0 0.0
    %105 = vmatpush1.msra.mxu0 0.0
    %106 = vmatprep.subr.mxu0 0.0
    %107 = vmatpush1.msra.mxu0 0.0
    %108 = vmatprep.subr.mxu0 0.0
    %109 = vmatpush1.msra.mxu0 0.0
    %110 = vmatprep.subr.mxu0 0.0
    %111 = vmatpush1.msra.mxu0 0.0
    %112 = vmatprep.subr.mxu0 0.0
    %113 = vmatpush1.msra.mxu0 0.0
    %114 = vmatprep.subr.mxu0 0.0
    %115 = vmatpush1.msra.mxu0 0.0
    %116 = vmatprep.subr.mxu0 0.0
    %117 = vmatpush1.msra.mxu0 0.0
    %118 = vmatprep.subr.mxu0 0.0
    %119 = vmatpush1.msra.mxu0 0.0
    %120 = vmatprep.subr.mxu0 0.0
    %121 = vmatpush1.msra.mxu0 0.0
    %122 = vmatprep.subr.mxu0 0.0
    %123 = vmatpush1.msra.mxu0 0.0
    %124 = vmatprep.subr.mxu0 0.0
    %125 = vmatpush1.msra.mxu0 0.0
    %126 = vmatprep.subr.mxu0 0.0
    %127 = vmatpush1.msra.mxu0 0.0
    %128 = vmatprep.subr.mxu0 0.0
    %129 = vmatpush1.msra.mxu0 0.0
    %130 = vmatprep.subr.mxu0 0.0
    %131 = vmatpush1.msra.mxu0 0.0
    %132 = vmatprep.subr.mxu0 0.0
    %133 = vmatpush1.msra.mxu0 0.0
    %134 = vmatprep.subr.mxu0 0.0
    %135 = vmatpush1.msra.mxu0 0.0
    %136 = vmatprep.subr.mxu0 0.0
    %137 = vmatpush1.msra.mxu0 0.0
    %138 = vmatprep.subr.mxu0 0.0
    %139 = vmatpush1.msra.mxu0 0.0
    %140 = vmatprep.subr.mxu0 0.0
    %141 = vmatpush1.msra.mxu0 0.0
    %142 = vmatprep.mubr.f32.mxu0 0.0
    %143 = vmatmul.mubr.f32.gmra.mrb[0].mxu0 %v76
    %v144 = vpop.f32.mrb[0].mxu0
    %v145 = vadd.f32 %v72, %v144
    %v146 = vpop.f32.mrb[0].mxu0
    %147 = vdwg.mxu0
    %v148 = vtanh.pop %v145
    %v149 = vmul.f32 %v148, 0.5
    %v150 = vadd.f32 %v149, 0.5
    %v151 = vld [vmem:[#allocation5] sm:$0xff]
    %153 = vrot.lane.b32.xlu0 %v151, 32
    %v154 = vpop.permute.xlu0 %153
    %v156 = vmul.f32 %v150, %v154
    %158 = vrot.lane.b32.xlu0 %v148, 32
    %v159 = vpop.permute.xlu0 %158
    %v161 = vmul.f32 %v150, %v159
    %163 = vrot.lane.b32.xlu0 %v161, 32
    %v164 = vpop.permute.xlu0 %163
    %v166 = vadd.f32 %v156, %v164
    %v167 = vtanh.pop %v166
    %169 = vrot.lane.b32.xlu0 %v167, 32
    %v170 = vpop.permute.xlu0 %169
    %v172 = vmul.f32 %v150, %v170
    %174 = vrot.lane.b32.xlu0 %v172, 64
    %v175 = vpop.permute.xlu0 %174
    %vm177 = vcmask 261120
    %178 = vst.msk [vmem:[#allocation8] sm:$0xff] %vm177, %v175
    %180 = vrot.lane.b32.xlu0 %v166, 96
    %v181 = vpop.permute.xlu0 %180
    %183 = vst.msk [vmem:[#allocation9] sm:$0xff] %vm177, %v181
    // Predicated region
    $region30: #{tpu_custom_call.1} parent=1 // pred_check
      _
    $region31: #{tpu_custom_call.1} parent=1 // pred_check_branch
      %185 = sbr.rel (0) target = $region33
    $region32: #{tpu_custom_call.1} parent=1 // pred_region
      %s187 = ssub.s32 128, 128
      %188 = vsyncadd [#allocation4], %s187
      %s190 = sshll.u32 [#allocation8], 4
      %s191 = int_to_ptr.vmem [resolvable:$true] %s190
      %193 = dma.vmem_to_hbm [thread:$0]  %s191, 128, %s4, [#allocation4]
    $region33: #{tpu_custom_call.1} parent=1 // pred_fallthru
      _
    // Predicated region
    $region34: #{tpu_custom_call.1} parent=1 // pred_check
      _
    $region35: #{tpu_custom_call.1} parent=1 // pred_check_branch
      %195 = sbr.rel (0) target = $region37
    $region36: #{tpu_custom_call.1} parent=1 // pred_region
      %s197 = ssub.s32 128, 128
      %198 = vsyncadd [#allocation10], %s197
      %s200 = sshll.u32 [#allocation9], 4
      %s201 = int_to_ptr.vmem [resolvable:$true] %s200
      %203 = dma.vmem_to_hbm [thread:$0]  %s201, 128, %s5, [#allocation10]
    $region37: #{tpu_custom_call.1} parent=1 // pred_fallthru
      _
    // Predicated region
    $region38: #{tpu_custom_call.1} parent=1 // pred_check
      _
    $region39: #{tpu_custom_call.1} parent=1 // pred_check_branch
      %205 = sbr.rel (0) target = $region41
    $region40: #{tpu_custom_call.1} parent=1 // pred_region
      %206 = dma.done [#allocation4], 128
    $region41: #{tpu_custom_call.1} parent=1 // pred_fallthru
      _
    // Predicated region
    $region42: #{tpu_custom_call.1} parent=1 // pred_check
      _
    $region43: #{tpu_custom_call.1} parent=1 // pred_check_branch
      %208 = sbr.rel (0) target = $region45
    $region44: #{tpu_custom_call.1} parent=1 // pred_region
      %209 = dma.done [#allocation10], 128
    $region45: #{tpu_custom_call.1} parent=1 // pred_fallthru
      _
    %210 = vsyncpa [#allocation3], 1
    %211 = vsyncpa [#allocation6], 1
    %212 = vsyncpa [#allocation4], 1
    %213 = vsyncpa [#allocation10], 1

</llo_original>
